<compile_context>
chip_gen: v5e
topology: v5e:2x2
jax: 0.10.0
libtpu: 0.0.40
codegen_flags: <defaults>
</compile_context>

<pallas_src>
import math
from functools import partial

import jax
import jax.numpy as jnp
from jax.experimental import pallas as pl
from jax.experimental.pallas import tpu as pltpu


# ----------------------------------------------------------------------------
# Helpers
# ----------------------------------------------------------------------------
def _round_up(v, m):
    return ((v + m - 1) // m) * m


def _pad_last(a, target):
    pad = target - a.shape[-1]
    if pad == 0:
        return a
    return jnp.concatenate(
        [a, jnp.zeros(a.shape[:-1] + (pad,), a.dtype)], axis=-1)


def _full_spec(a):
    # Whole-array VMEM-resident block with a constant index map (grid=(1,)).
    nd = a.ndim
    return pl.BlockSpec(a.shape, lambda i, _nd=nd: (0,) * _nd)


# ----------------------------------------------------------------------------
# Fused forward kernel
#   inputs (in order):
#     x2d                  (B*N, Din)
#     [w_l, b_l] * nbase   (Din_l, Dout_l), (1, Dout_l)
#     wt_stack, bt_stack   (NC, Denc, Ht), (NC, 1, Ht)
#     w1_stack, b1_stack   (T, Ht, Hf),   (T, 1, Hf)
#     w2_stack, b2_stack   (T, Hf, Cpad), (T, 1, Cpad)      (class-dim padded)
#   output:
#     out                  (B, T*Cpad)   lane-dense logits slab
# ----------------------------------------------------------------------------
def _fused_forward_kernel(*refs, nbase, B, N, task_cids, used_cids):
    idx = 0
    x_ref = refs[idx]; idx += 1
    base_refs = []
    for _ in range(nbase):
        base_refs.append((refs[idx], refs[idx + 1]))
        idx += 2
    wt_ref, bt_ref = refs[idx], refs[idx + 1]; idx += 2
    w1_ref, b1_ref = refs[idx], refs[idx + 1]; idx += 2
    w2_ref, b2_ref = refs[idx], refs[idx + 1]; idx += 2
    out_ref = refs[idx]

    # ---- base network on flattened (B*N, Din) rows (MXU-friendly M dim) ----
    h = x_ref[...].astype(jnp.float32)
    for (w_r, b_r) in base_refs:
        h = jnp.dot(h, w_r[...], preferred_element_type=jnp.float32) + b_r[...]
        h = jnp.maximum(h, 0.0)

    # ---- max aggregation over the instance axis (dim=1) --------------------
    denc = h.shape[-1]
    agg = jnp.max(h.reshape(B, N, denc), axis=1)          # (B, Denc)

    # ---- cluster trunks: computed once per *cluster*, reused by its tasks --
    trunk_out = {}
    for cid in used_cids:                                  # static python ints
        t = jnp.dot(agg, wt_ref[cid],
                    preferred_element_type=jnp.float32) + bt_ref[cid]
        trunk_out[cid] = jnp.maximum(t, 0.0)               # (B, Ht)

    # ---- task heads (Dropout = identity in eval) ----------------------------
    logits = []
    for t_idx, cid in enumerate(task_cids):
        h1 = jnp.dot(trunk_out[cid], w1_ref[t_idx],
                     preferred_element_type=jnp.float32) + b1_ref[t_idx]
        h1 = jnp.maximum(h1, 0.0)
        logits.append(jnp.dot(h1, w2_ref[t_idx],
                              preferred_element_type=jnp.float32) + b2_ref[t_idx])

    # Single lane-dense store of all task logits.
    out_ref[...] = jnp.concatenate(logits, axis=-1).astype(out_ref.dtype)


# ----------------------------------------------------------------------------
# Parameter construction (deterministic xavier_uniform, zero bias), matching
# the PyTorch module's __init__ shapes.  Weights stored as (in, out).
# ----------------------------------------------------------------------------
def xavier_uniform(key, fan_in, fan_out, dtype=jnp.float32):
    bound = math.sqrt(6.0 / (fan_in + fan_out))
    # PyTorch weight is (out, in); sample that shape then transpose to (in, out).
    w = jax.random.uniform(key, (fan_out, fan_in), dtype=dtype,
                           minval=-bound, maxval=bound)
    return jnp.asarray(w.T)


def init_clustered_max_mlp(key, input_dim, output_dims_dict, num_clusters,
                           hidden_dim_cluster_trunk, hidden_dim_final_head,
                           autoencoder_layer_sizes=None):
    params = {}
    keys = iter(jax.random.split(key, 64))

    base = []
    if autoencoder_layer_sizes:
        for d_in, d_out in zip(autoencoder_layer_sizes[:-1],
                               autoencoder_layer_sizes[1:]):
            w = xavier_uniform(next(keys), d_in, d_out)
            b = jnp.zeros((d_out,), jnp.float32)
            base.append((w, b))
    params["base"] = base

    dim_agg = (autoencoder_layer_sizes[-1] if autoencoder_layer_sizes
               else input_dim)

    trunks = []
    for _ in range(num_clusters):
        w = xavier_uniform(next(keys), dim_agg, hidden_dim_cluster_trunk)
        b = jnp.zeros((hidden_dim_cluster_trunk,), jnp.float32)
        trunks.append((w, b))
    params["trunks"] = trunks

    heads = {}
    for task_name, num_classes in output_dims_dict.items():
        w1 = xavier_uniform(next(keys), hidden_dim_cluster_trunk,
                            hidden_dim_final_head)
        b1 = jnp.zeros((hidden_dim_final_head,), jnp.float32)
        w2 = xavier_uniform(next(keys), hidden_dim_final_head, num_classes)
        b2 = jnp.zeros((num_classes,), jnp.float32)
        heads[task_name] = (w1, b1, w2, b2)
    params["heads"] = heads
    return params


# ----------------------------------------------------------------------------
# Full forward: one fused pallas_call; only static dispatch in Python.
# ----------------------------------------------------------------------------
def clustered_max_mlp_forward(params, x, output_dims_dict, num_clusters,
                              task_to_cluster_id_map):
    B, N, Din = x.shape
    dtype = x.dtype

    # Partition tasks into valid (run in-kernel) and invalid (zero-filled,
    # matching the PyTorch module).
    valid = []       # (task_name, cluster_id, num_classes) in dict order
    outputs = {}
    for task_name, num_classes in output_dims_dict.items():
        cid = task_to_cluster_id_map.get(task_name)
        if cid is None or not (0 <= cid < num_clusters):
            outputs[task_name] = jnp.zeros((B, num_classes), dtype=dtype)
        else:
            valid.append((task_name, cid, num_classes))
    if not valid:
        return outputs

    # ---- stack / pad parameters for the fused kernel -----------------------
    CPAD = max(128, _round_up(max(c for _, _, c in valid), 128))
    wt_stack = jnp.stack([w for (w, _) in params["trunks"]])               # (NC, Denc, Ht)
    bt_stack = jnp.stack([b.reshape(1, -1) for (_, b) in params["trunks"]])  # (NC, 1, Ht)

    w1_l, b1_l, w2_l, b2_l = [], [], [], []
    for task_name, _cid, _c in valid:
        w1, b1, w2, b2 = params["heads"][task_name]
        w1_l.append(w1)
        b1_l.append(b1.reshape(1, -1))
        w2_l.append(_pad_last(w2, CPAD))
        b2_l.append(_pad_last(b2.reshape(1, -1), CPAD))
    w1_stack = jnp.stack(w1_l)        # (T, Ht, Hf)
    b1_stack = jnp.stack(b1_l)        # (T, 1, Hf)
    w2_stack = jnp.stack(w2_l)        # (T, Hf, CPAD)
    b2_stack = jnp.stack(b2_l)        # (T, 1, CPAD)

    # ---- single fused pallas_call -------------------------------------------
    x2d = x.reshape(B * N, Din)
    inputs = [x2d]
    for (w, b) in params["base"]:
        inputs.extend([w, b.reshape(1, -1)])
    inputs.extend([wt_stack, bt_stack, w1_stack, b1_stack, w2_stack, b2_stack])

    task_cids = tuple(cid for _, cid, _ in valid)
    used_cids = tuple(sorted({cid for _, cid, _ in valid}))
    Tv = len(valid)

    kernel = partial(_fused_forward_kernel,
                     nbase=len(params["base"]), B=B, N=N,
                     task_cids=task_cids, used_cids=used_cids)

    out_slab = pl.pallas_call(
        kernel,
        out_shape=jax.ShapeDtypeStruct((B, Tv * CPAD), dtype),
        grid=(1,),
        in_specs=[_full_spec(a) for a in inputs],
        out_specs=pl.BlockSpec((B, Tv * CPAD), lambda i: (0, 0)),
        compiler_params=pltpu.CompilerParams(
            dimension_semantics=("arbitrary",)),
    )(*inputs)

    for i, (task_name, _cid, num_classes) in enumerate(valid):
        outputs[task_name] = out_slab[:, i * CPAD:i * CPAD + num_classes]
    return outputs


# ----------------------------------------------------------------------------
# Pure-JAX reference for a correctness check.
# ----------------------------------------------------------------------------
def reference_forward(params, x, output_dims_dict, num_clusters,
                      task_to_cluster_id_map):
    h = x
    for (w, b) in params["base"]:
        h = jnp.maximum(jnp.einsum("bnd,de->bne", h, w) + b, 0.0)
    agg = jnp.max(h, axis=1)
    outputs = {}
    for task_name, num_classes in output_dims_dict.items():
        cid = task_to_cluster_id_map.get(task_name)
        if cid is None or not (0 <= cid < num_clusters):
            outputs[task_name] = jnp.zeros((agg.shape[0], num_classes), x.dtype)
            continue
        wt, bt = params["trunks"][cid]
        w1, b1, w2, b2 = params["heads"][task_name]
        t = jnp.maximum(agg @ wt + bt, 0.0)
        hh = jnp.maximum(t @ w1 + b1, 0.0)
        outputs[task_name] = hh @ w2 + b2
    return outputs


if __name__ == "__main__":
    # Small, module-consistent shapes.
    B, N, INPUT_DIM = 2, 8, 16           # (batch, instances per bag, feature dim)
    AUTOENCODER_SIZES = [INPUT_DIM, 32]  # one Linear+ReLU base layer
    NUM_CLUSTERS = 2
    HIDDEN_TRUNK = 32
    HIDDEN_HEAD = 32
    # task_c shares cluster 0 with task_a (exercises trunk reuse);
    # task_d has an out-of-range cluster id (exercises the zero-fill path).
    OUTPUT_DIMS = {"task_a": 4, "task_b": 6, "task_c": 3, "task_d": 5}
    TASK_TO_CLUSTER = {"task_a": 0, "task_b": 1, "task_c": 0, "task_d": 7}

    key = jax.random.PRNGKey(0)
    k_x, k_p = jax.random.split(key)
    x = jax.random.normal(k_x, (B, N, INPUT_DIM), dtype=jnp.float32)

    params = init_clustered_max_mlp(
        k_p, INPUT_DIM, OUTPUT_DIMS, NUM_CLUSTERS, HIDDEN_TRUNK, HIDDEN_HEAD,
        autoencoder_layer_sizes=AUTOENCODER_SIZES)

    outs = clustered_max_mlp_forward(params, x, OUTPUT_DIMS, NUM_CLUSTERS,
                                     TASK_TO_CLUSTER)
    outs = {k: jax.block_until_ready(v) for k, v in outs.items()}

    refs = reference_forward(params, x, OUTPUT_DIMS, NUM_CLUSTERS,
                             TASK_TO_CLUSTER)
    for name in OUTPUT_DIMS:
        assert outs[name].shape == refs[name].shape, name
        assert jnp.allclose(outs[name], refs[name], atol=1e-5, rtol=1e-5), name

    print("KERNEL_OK")
</pallas_src>

<mosaic_0001>
module attributes {stable_mosaic.version = 11 : i64} {
  func.func @_fused_forward_kernel(%arg0: i32, %arg1: memref<16x16xf32, #tpu.memory_space<vmem>>, %arg2: memref<16x32xf32, #tpu.memory_space<vmem>>, %arg3: memref<1x32xf32, #tpu.memory_space<vmem>>, %arg4: memref<2x32x32xf32, #tpu.memory_space<vmem>>, %arg5: memref<2x1x32xf32, #tpu.memory_space<vmem>>, %arg6: memref<3x32x32xf32, #tpu.memory_space<vmem>>, %arg7: memref<3x1x32xf32, #tpu.memory_space<vmem>>, %arg8: memref<3x32x128xf32, #tpu.memory_space<vmem>>, %arg9: memref<3x1x128xf32, #tpu.memory_space<vmem>>, %arg10: memref<2x384xf32, #tpu.memory_space<vmem>>) attributes {dimension_semantics = [#tpu.dimension_semantics<arbitrary>], iteration_bounds = array<i64: 1>, scalar_prefetch = 0 : i64, scratch_operands = 0 : i64, tpu.core_type = #tpu.core_type<tc>, window_params = [{pipeline_mode = #tpu.pipeline_mode<synchronous>, transform_indices = @transform_0, window_bounds = array<i64: 16, 16>}, {pipeline_mode = #tpu.pipeline_mode<synchronous>, transform_indices = @transform_1, window_bounds = array<i64: 16, 32>}, {pipeline_mode = #tpu.pipeline_mode<synchronous>, transform_indices = @transform_2, window_bounds = array<i64: 1, 32>}, {pipeline_mode = #tpu.pipeline_mode<synchronous>, transform_indices = @transform_3, window_bounds = array<i64: 2, 32, 32>}, {pipeline_mode = #tpu.pipeline_mode<synchronous>, transform_indices = @transform_4, window_bounds = array<i64: 2, 1, 32>}, {pipeline_mode = #tpu.pipeline_mode<synchronous>, transform_indices = @transform_5, window_bounds = array<i64: 3, 32, 32>}, {pipeline_mode = #tpu.pipeline_mode<synchronous>, transform_indices = @transform_6, window_bounds = array<i64: 3, 1, 32>}, {pipeline_mode = #tpu.pipeline_mode<synchronous>, transform_indices = @transform_7, window_bounds = array<i64: 3, 32, 128>}, {pipeline_mode = #tpu.pipeline_mode<synchronous>, transform_indices = @transform_8, window_bounds = array<i64: 3, 1, 128>}, {pipeline_mode = #tpu.pipeline_mode<synchronous>, transform_indices = @transform_9, window_bounds = array<i64: 2, 384>}]} {
    %c0 = arith.constant 0 : index
    %c0_0 = arith.constant 0 : index
    %0 = vector.load %arg1[%c0, %c0_0] : memref<16x16xf32, #tpu.memory_space<vmem>>, vector<16x16xf32>
    %c0_1 = arith.constant 0 : index
    %c0_2 = arith.constant 0 : index
    %1 = vector.load %arg2[%c0_1, %c0_2] : memref<16x32xf32, #tpu.memory_space<vmem>>, vector<16x32xf32>
    %cst = arith.constant dense<0.000000e+00> : vector<16x32xf32>
    %2 = tpu.matmul %0, %1, %cst {dimension_numbers = #tpu.dot_dimension_numbers<[1], [0], [0], [1], [0, 0, 1, 1], [], []>} : vector<16x16xf32>, vector<16x32xf32>, vector<16x32xf32> -> vector<16x32xf32>
    %c0_3 = arith.constant 0 : index
    %c0_4 = arith.constant 0 : index
    %3 = vector.load %arg3[%c0_3, %c0_4] : memref<1x32xf32, #tpu.memory_space<vmem>>, vector<1x32xf32>
    %4 = vector.broadcast %3 : vector<1x32xf32> to vector<16x32xf32>
    %5 = arith.addf %2, %4 : vector<16x32xf32>
    %cst_5 = arith.constant 0.000000e+00 : f32
    %6 = vector.broadcast %cst_5 : f32 to vector<16x32xf32>
    %7 = arith.maximumf %5, %6 : vector<16x32xf32>
    %8 = vector.shape_cast %7 : vector<16x32xf32> to vector<2x8x32xf32>
    %cst_6 = arith.constant dense<0xFF800000> : vector<2x32xf32>
    %9 = vector.multi_reduction <maximumf>, %8, %cst_6 [1] : vector<2x8x32xf32> to vector<2x32xf32>
    %c0_7 = arith.constant 0 : index
    %c0_8 = arith.constant 0 : index
    %c0_9 = arith.constant 0 : index
    %10 = vector.load %arg4[%c0_7, %c0_8, %c0_9] : memref<2x32x32xf32, #tpu.memory_space<vmem>>, vector<1x32x32xf32>
    %11 = vector.shape_cast %10 : vector<1x32x32xf32> to vector<32x32xf32>
    %cst_10 = arith.constant dense<0.000000e+00> : vector<2x32xf32>
    %12 = tpu.matmul %9, %11, %cst_10 {dimension_numbers = #tpu.dot_dimension_numbers<[1], [0], [0], [1], [0, 0, 1, 1], [], []>} : vector<2x32xf32>, vector<32x32xf32>, vector<2x32xf32> -> vector<2x32xf32>
    %c0_11 = arith.constant 0 : index
    %c0_12 = arith.constant 0 : index
    %c0_13 = arith.constant 0 : index
    %13 = vector.load %arg5[%c0_11, %c0_12, %c0_13] : memref<2x1x32xf32, #tpu.memory_space<vmem>>, vector<1x1x32xf32>
    %14 = vector.shape_cast %13 : vector<1x1x32xf32> to vector<1x32xf32>
    %15 = vector.broadcast %14 : vector<1x32xf32> to vector<2x32xf32>
    %16 = arith.addf %12, %15 : vector<2x32xf32>
    %cst_14 = arith.constant 0.000000e+00 : f32
    %17 = vector.broadcast %cst_14 : f32 to vector<2x32xf32>
    %18 = arith.maximumf %16, %17 : vector<2x32xf32>
    %c1 = arith.constant 1 : index
    %c0_15 = arith.constant 0 : index
    %c0_16 = arith.constant 0 : index
    %19 = vector.load %arg4[%c1, %c0_15, %c0_16] : memref<2x32x32xf32, #tpu.memory_space<vmem>>, vector<1x32x32xf32>
    %20 = vector.shape_cast %19 : vector<1x32x32xf32> to vector<32x32xf32>
    %cst_17 = arith.constant dense<0.000000e+00> : vector<2x32xf32>
    %21 = tpu.matmul %9, %20, %cst_17 {dimension_numbers = #tpu.dot_dimension_numbers<[1], [0], [0], [1], [0, 0, 1, 1], [], []>} : vector<2x32xf32>, vector<32x32xf32>, vector<2x32xf32> -> vector<2x32xf32>
    %c1_18 = arith.constant 1 : index
    %c0_19 = arith.constant 0 : index
    %c0_20 = arith.constant 0 : index
    %22 = vector.load %arg5[%c1_18, %c0_19, %c0_20] : memref<2x1x32xf32, #tpu.memory_space<vmem>>, vector<1x1x32xf32>
    %23 = vector.shape_cast %22 : vector<1x1x32xf32> to vector<1x32xf32>
    %24 = vector.broadcast %23 : vector<1x32xf32> to vector<2x32xf32>
    %25 = arith.addf %21, %24 : vector<2x32xf32>
    %cst_21 = arith.constant 0.000000e+00 : f32
    %26 = vector.broadcast %cst_21 : f32 to vector<2x32xf32>
    %27 = arith.maximumf %25, %26 : vector<2x32xf32>
    %c0_22 = arith.constant 0 : index
    %c0_23 = arith.constant 0 : index
    %c0_24 = arith.constant 0 : index
    %28 = vector.load %arg6[%c0_22, %c0_23, %c0_24] : memref<3x32x32xf32, #tpu.memory_space<vmem>>, vector<1x32x32xf32>
    %29 = vector.shape_cast %28 : vector<1x32x32xf32> to vector<32x32xf32>
    %cst_25 = arith.constant dense<0.000000e+00> : vector<2x32xf32>
    %30 = tpu.matmul %18, %29, %cst_25 {dimension_numbers = #tpu.dot_dimension_numbers<[1], [0], [0], [1], [0, 0, 1, 1], [], []>} : vector<2x32xf32>, vector<32x32xf32>, vector<2x32xf32> -> vector<2x32xf32>
    %c0_26 = arith.constant 0 : index
    %c0_27 = arith.constant 0 : index
    %c0_28 = arith.constant 0 : index
    %31 = vector.load %arg7[%c0_26, %c0_27, %c0_28] : memref<3x1x32xf32, #tpu.memory_space<vmem>>, vector<1x1x32xf32>
    %32 = vector.shape_cast %31 : vector<1x1x32xf32> to vector<1x32xf32>
    %33 = vector.broadcast %32 : vector<1x32xf32> to vector<2x32xf32>
    %34 = arith.addf %30, %33 : vector<2x32xf32>
    %cst_29 = arith.constant 0.000000e+00 : f32
    %35 = vector.broadcast %cst_29 : f32 to vector<2x32xf32>
    %36 = arith.maximumf %34, %35 : vector<2x32xf32>
    %c0_30 = arith.constant 0 : index
    %c0_31 = arith.constant 0 : index
    %c0_32 = arith.constant 0 : index
    %37 = vector.load %arg8[%c0_30, %c0_31, %c0_32] : memref<3x32x128xf32, #tpu.memory_space<vmem>>, vector<1x32x128xf32>
    %38 = vector.shape_cast %37 : vector<1x32x128xf32> to vector<32x128xf32>
    %cst_33 = arith.constant dense<0.000000e+00> : vector<2x128xf32>
    %39 = tpu.matmul %36, %38, %cst_33 {dimension_numbers = #tpu.dot_dimension_numbers<[1], [0], [0], [1], [0, 0, 1, 1], [], []>} : vector<2x32xf32>, vector<32x128xf32>, vector<2x128xf32> -> vector<2x128xf32>
    %c0_34 = arith.constant 0 : index
    %c0_35 = arith.constant 0 : index
    %c0_36 = arith.constant 0 : index
    %40 = vector.load %arg9[%c0_34, %c0_35, %c0_36] : memref<3x1x128xf32, #tpu.memory_space<vmem>>, vector<1x1x128xf32>
    %41 = vector.shape_cast %40 : vector<1x1x128xf32> to vector<1x128xf32>
    %42 = vector.broadcast %41 : vector<1x128xf32> to vector<2x128xf32>
    %43 = arith.addf %39, %42 : vector<2x128xf32>
    %c1_37 = arith.constant 1 : index
    %c0_38 = arith.constant 0 : index
    %c0_39 = arith.constant 0 : index
    %44 = vector.load %arg6[%c1_37, %c0_38, %c0_39] : memref<3x32x32xf32, #tpu.memory_space<vmem>>, vector<1x32x32xf32>
    %45 = vector.shape_cast %44 : vector<1x32x32xf32> to vector<32x32xf32>
    %cst_40 = arith.constant dense<0.000000e+00> : vector<2x32xf32>
    %46 = tpu.matmul %27, %45, %cst_40 {dimension_numbers = #tpu.dot_dimension_numbers<[1], [0], [0], [1], [0, 0, 1, 1], [], []>} : vector<2x32xf32>, vector<32x32xf32>, vector<2x32xf32> -> vector<2x32xf32>
    %c1_41 = arith.constant 1 : index
    %c0_42 = arith.constant 0 : index
    %c0_43 = arith.constant 0 : index
    %47 = vector.load %arg7[%c1_41, %c0_42, %c0_43] : memref<3x1x32xf32, #tpu.memory_space<vmem>>, vector<1x1x32xf32>
    %48 = vector.shape_cast %47 : vector<1x1x32xf32> to vector<1x32xf32>
    %49 = vector.broadcast %48 : vector<1x32xf32> to vector<2x32xf32>
    %50 = arith.addf %46, %49 : vector<2x32xf32>
    %cst_44 = arith.constant 0.000000e+00 : f32
    %51 = vector.broadcast %cst_44 : f32 to vector<2x32xf32>
    %52 = arith.maximumf %50, %51 : vector<2x32xf32>
    %c1_45 = arith.constant 1 : index
    %c0_46 = arith.constant 0 : index
    %c0_47 = arith.constant 0 : index
    %53 = vector.load %arg8[%c1_45, %c0_46, %c0_47] : memref<3x32x128xf32, #tpu.memory_space<vmem>>, vector<1x32x128xf32>
    %54 = vector.shape_cast %53 : vector<1x32x128xf32> to vector<32x128xf32>
    %cst_48 = arith.constant dense<0.000000e+00> : vector<2x128xf32>
    %55 = tpu.matmul %52, %54, %cst_48 {dimension_numbers = #tpu.dot_dimension_numbers<[1], [0], [0], [1], [0, 0, 1, 1], [], []>} : vector<2x32xf32>, vector<32x128xf32>, vector<2x128xf32> -> vector<2x128xf32>
    %c1_49 = arith.constant 1 : index
    %c0_50 = arith.constant 0 : index
    %c0_51 = arith.constant 0 : index
    %56 = vector.load %arg9[%c1_49, %c0_50, %c0_51] : memref<3x1x128xf32, #tpu.memory_space<vmem>>, vector<1x1x128xf32>
    %57 = vector.shape_cast %56 : vector<1x1x128xf32> to vector<1x128xf32>
    %58 = vector.broadcast %57 : vector<1x128xf32> to vector<2x128xf32>
    %59 = arith.addf %55, %58 : vector<2x128xf32>
    %c2 = arith.constant 2 : index
    %c0_52 = arith.constant 0 : index
    %c0_53 = arith.constant 0 : index
    %60 = vector.load %arg6[%c2, %c0_52, %c0_53] : memref<3x32x32xf32, #tpu.memory_space<vmem>>, vector<1x32x32xf32>
    %61 = vector.shape_cast %60 : vector<1x32x32xf32> to vector<32x32xf32>
    %cst_54 = arith.constant dense<0.000000e+00> : vector<2x32xf32>
    %62 = tpu.matmul %18, %61, %cst_54 {dimension_numbers = #tpu.dot_dimension_numbers<[1], [0], [0], [1], [0, 0, 1, 1], [], []>} : vector<2x32xf32>, vector<32x32xf32>, vector<2x32xf32> -> vector<2x32xf32>
    %c2_55 = arith.constant 2 : index
    %c0_56 = arith.constant 0 : index
    %c0_57 = arith.constant 0 : index
    %63 = vector.load %arg7[%c2_55, %c0_56, %c0_57] : memref<3x1x32xf32, #tpu.memory_space<vmem>>, vector<1x1x32xf32>
    %64 = vector.shape_cast %63 : vector<1x1x32xf32> to vector<1x32xf32>
    %65 = vector.broadcast %64 : vector<1x32xf32> to vector<2x32xf32>
    %66 = arith.addf %62, %65 : vector<2x32xf32>
    %cst_58 = arith.constant 0.000000e+00 : f32
    %67 = vector.broadcast %cst_58 : f32 to vector<2x32xf32>
    %68 = arith.maximumf %66, %67 : vector<2x32xf32>
    %c2_59 = arith.constant 2 : index
    %c0_60 = arith.constant 0 : index
    %c0_61 = arith.constant 0 : index
    %69 = vector.load %arg8[%c2_59, %c0_60, %c0_61] : memref<3x32x128xf32, #tpu.memory_space<vmem>>, vector<1x32x128xf32>
    %70 = vector.shape_cast %69 : vector<1x32x128xf32> to vector<32x128xf32>
    %cst_62 = arith.constant dense<0.000000e+00> : vector<2x128xf32>
    %71 = tpu.matmul %68, %70, %cst_62 {dimension_numbers = #tpu.dot_dimension_numbers<[1], [0], [0], [1], [0, 0, 1, 1], [], []>} : vector<2x32xf32>, vector<32x128xf32>, vector<2x128xf32> -> vector<2x128xf32>
    %c2_63 = arith.constant 2 : index
    %c0_64 = arith.constant 0 : index
    %c0_65 = arith.constant 0 : index
    %72 = vector.load %arg9[%c2_63, %c0_64, %c0_65] : memref<3x1x128xf32, #tpu.memory_space<vmem>>, vector<1x1x128xf32>
    %73 = vector.shape_cast %72 : vector<1x1x128xf32> to vector<1x128xf32>
    %74 = vector.broadcast %73 : vector<1x128xf32> to vector<2x128xf32>
    %75 = arith.addf %71, %74 : vector<2x128xf32>
    %76 = tpu.concatenate %43, %59, %75 in 1 : vector<2x128xf32>, vector<2x128xf32>, vector<2x128xf32> -> vector<2x384xf32>
    %c0_66 = arith.constant 0 : index
    %c0_67 = arith.constant 0 : index
    %77 = vector.load %arg10[%c0_66, %c0_67] : memref<2x384xf32, #tpu.memory_space<vmem>>, vector<2x384xf32>
    tpu.vector_store %arg10[%c0_66, %c0_67], %76 {strides = array<i32>} : memref<2x384xf32, #tpu.memory_space<vmem>>, vector<2x384xf32>,
    return
  }
  func.func @transform_0(%arg0: i32) -> (i32, i32) {
    %c0_i32 = arith.constant 0 : i32
    %c0_i32_0 = arith.constant 0 : i32
    %c0_i32_1 = arith.constant 0 : i32
    return %c0_i32, %c0_i32_0 : i32, i32
  }
  func.func @transform_1(%arg0: i32) -> (i32, i32) {
    %c0_i32 = arith.constant 0 : i32
    %c0_i32_0 = arith.constant 0 : i32
    %c0_i32_1 = arith.constant 0 : i32
    return %c0_i32, %c0_i32_0 : i32, i32
  }
  func.func @transform_2(%arg0: i32) -> (i32, i32) {
    %c0_i32 = arith.constant 0 : i32
    %c0_i32_0 = arith.constant 0 : i32
    %c0_i32_1 = arith.constant 0 : i32
    return %c0_i32, %c0_i32_0 : i32, i32
  }
  func.func @transform_3(%arg0: i32) -> (i32, i32, i32) {
    %c0_i32 = arith.constant 0 : i32
    %c0_i32_0 = arith.constant 0 : i32
    %c0_i32_1 = arith.constant 0 : i32
    %c0_i32_2 = arith.constant 0 : i32
    return %c0_i32, %c0_i32_0, %c0_i32_1 : i32, i32, i32
  }
  func.func @transform_4(%arg0: i32) -> (i32, i32, i32) {
    %c0_i32 = arith.constant 0 : i32
    %c0_i32_0 = arith.constant 0 : i32
    %c0_i32_1 = arith.constant 0 : i32
    %c0_i32_2 = arith.constant 0 : i32
    return %c0_i32, %c0_i32_0, %c0_i32_1 : i32, i32, i32
  }
  func.func @transform_5(%arg0: i32) -> (i32, i32, i32) {
    %c0_i32 = arith.constant 0 : i32
    %c0_i32_0 = arith.constant 0 : i32
    %c0_i32_1 = arith.constant 0 : i32
    %c0_i32_2 = arith.constant 0 : i32
    return %c0_i32, %c0_i32_0, %c0_i32_1 : i32, i32, i32
  }
  func.func @transform_6(%arg0: i32) -> (i32, i32, i32) {
    %c0_i32 = arith.constant 0 : i32
    %c0_i32_0 = arith.constant 0 : i32
    %c0_i32_1 = arith.constant 0 : i32
    %c0_i32_2 = arith.constant 0 : i32
    return %c0_i32, %c0_i32_0, %c0_i32_1 : i32, i32, i32
  }
  func.func @transform_7(%arg0: i32) -> (i32, i32, i32) {
    %c0_i32 = arith.constant 0 : i32
    %c0_i32_0 = arith.constant 0 : i32
    %c0_i32_1 = arith.constant 0 : i32
    %c0_i32_2 = arith.constant 0 : i32
    return %c0_i32, %c0_i32_0, %c0_i32_1 : i32, i32, i32
  }
  func.func @transform_8(%arg0: i32) -> (i32, i32, i32) {
    %c0_i32 = arith.constant 0 : i32
    %c0_i32_0 = arith.constant 0 : i32
    %c0_i32_1 = arith.constant 0 : i32
    %c0_i32_2 = arith.constant 0 : i32
    return %c0_i32, %c0_i32_0, %c0_i32_1 : i32, i32, i32
  }
  func.func @transform_9(%arg0: i32) -> (i32, i32) {
    %c0_i32 = arith.constant 0 : i32
    %c0_i32_0 = arith.constant 0 : i32
    %c0_i32_1 = arith.constant 0 : i32
    return %c0_i32, %c0_i32_0 : i32, i32
  }
}

</mosaic_0001>

<llo_original>
// kernel: tpu_custom_call.1
$region0: #{tpu_custom_call.1}
  #allocation0 [shape = 'u32[]', space=smem, size = 0x4, offset = 0x4, fixed_abs, tag = 'smem constant byte address 0x4 - core index']
  #allocation1 [shape = 'u32[72,128]{1,0:T(1,128)}', space=vmem, size = 0x9000, scoped, tag = 'internal scratch']
  %s0 = inlined_call_operand.hbm [shape: f32[16,16], index: 0, kind: input, shape index: {}]
  %s1 = inlined_call_operand.hbm [shape: f32[16,32], index: 1, kind: input, shape index: {}]
  %s2 = inlined_call_operand.hbm [shape: f32[1,32], index: 2, kind: input, shape index: {}]
  %s3 = inlined_call_operand.hbm [shape: f32[2,32,32], index: 3, kind: input, shape index: {}]
  %s4 = inlined_call_operand.hbm [shape: f32[2,1,32], index: 4, kind: input, shape index: {}]
  %s5 = inlined_call_operand.hbm [shape: f32[3,32,32], index: 5, kind: input, shape index: {}]
  %s6 = inlined_call_operand.vmem [shape: f32[3,1,32], index: 6, kind: input, shape index: {}]
  %s7 = inlined_call_operand.hbm [shape: f32[3,32,128], index: 7, kind: input, shape index: {}]
  %s8 = inlined_call_operand.vmem [shape: f32[3,1,128], index: 8, kind: input, shape index: {}]
  %s9 = inlined_call_operand.hbm [shape: f32[2,384], index: 9, kind: output, shape index: {}]
  %s10 = sld [smem:[#allocation0]]
  $region74: #{tpu_custom_call.1} parent=0
    _
  %s12 = ssub.s32 1, %s10
  %s13 = scalar_select 0, %s12, %s10
  $region1: #{tpu_custom_call.1} parent=0
    #allocation2 [shape = 'u8[8192]{0}', space=vmem, size = 0x2000, scoped, tag = 'input window, operand 0, single buffered']
    #allocation3 [shape = 's32[1]{0}', space=sflag, size = 0x4, scoped, tag = 'scoped memory for tpu_custom_call.1']
    #allocation4 [shape = 's32[1]{0}', space=sflag, size = 0x4, scoped, tag = 'scoped memory for tpu_custom_call.1']
    #allocation5 [shape = 'u8[8192]{0}', space=vmem, size = 0x2000, scoped, tag = 'input window, operand 1, single buffered']
    #allocation6 [shape = 's32[1]{0}', space=sflag, size = 0x4, scoped, tag = 'scoped memory for tpu_custom_call.1']
    #allocation7 [shape = 'u8[512]{0}', space=vmem, size = 0x400, scoped, tag = 'input window, operand 2, single buffered']
    #allocation8 [shape = 'u8[32768]{0}', space=vmem, size = 0x8000, scoped, tag = 'input window, operand 3, single buffered']
    #allocation9 [shape = 's32[1]{0}', space=sflag, size = 0x4, scoped, tag = 'scoped memory for tpu_custom_call.1']
    #allocation10 [shape = 'u8[1024]{0}', space=vmem, size = 0x400, scoped, tag = 'input window, operand 4, single buffered']
    #allocation11 [shape = 'u8[49152]{0}', space=vmem, size = 0xc000, scoped, tag = 'input window, operand 5, single buffered']
    #allocation12 [shape = 's32[1]{0}', space=sflag, size = 0x4, scoped, tag = 'scoped memory for tpu_custom_call.1']
    #allocation13 [shape = 'u8[49152]{0}', space=vmem, size = 0xc000, scoped, tag = 'input window, operand 7, single buffered']
    #allocation14 [shape = 'u8[3072]{0}', space=vmem, size = 0xc00, scoped, tag = 'output window, operand 0, single buffered']
    %14 = vsyncpa [#allocation3], 0
    %15 = vsyncpa [#allocation6], 0
    %16 = vsyncpa [#allocation9], 0
    %17 = vsyncpa [#allocation12], 0
    %18 = vsyncpa [#allocation4], 0
    // Predicated region
    $region2: #{tpu_custom_call.1} parent=1 // pred_check
      _
    $region3: #{tpu_custom_call.1} parent=1 // pred_check_branch
      %20 = sbr.rel (0) target = $region5
    $region4: #{tpu_custom_call.1} parent=1 // pred_region
      %22 = vsyncadd [#allocation3], 0
      %s23 = sshll.u32 %s0, 4
      %s24 = int_to_ptr.hbm [resolvable:$true] %s23
      %s25 = sshll.u32 [#allocation2], 4
      %s26 = int_to_ptr.vmem [resolvable:$true] %s25
      %31 = dma.hbm_to_vmem [thread:$0]  %s24, 256, %s26, [#allocation3], 128, 128, 8
    $region5: #{tpu_custom_call.1} parent=1 // pred_fallthru
      _
    // Predicated region
    $region6: #{tpu_custom_call.1} parent=1 // pred_check
      _
    $region7: #{tpu_custom_call.1} parent=1 // pred_check_branch
      %33 = sbr.rel (0) target = $region9
    $region8: #{tpu_custom_call.1} parent=1 // pred_region
      %35 = vsyncadd [#allocation6], 0
      %s36 = sshll.u32 %s1, 4
      %s37 = int_to_ptr.hbm [resolvable:$true] %s36
      %s38 = sshll.u32 [#allocation5], 4
      %s39 = int_to_ptr.vmem [resolvable:$true] %s38
      %44 = dma.hbm_to_vmem [thread:$0]  %s37, 256, %s39, [#allocation6], 128, 128, 8
    $region9: #{tpu_custom_call.1} parent=1 // pred_fallthru
      _
    // Predicated region
    $region10: #{tpu_custom_call.1} parent=1 // pred_check
      _
    $region11: #{tpu_custom_call.1} parent=1 // pred_check_branch
      %46 = sbr.rel (0) target = $region13
    $region12: #{tpu_custom_call.1} parent=1 // pred_region
      %48 = vsyncadd [#allocation6], 0
      %s50 = sshll.u32 %s2, 4
      %s51 = int_to_ptr.hbm [resolvable:$true] %s50
      %s52 = sshll.u32 [#allocation7], 4
      %s53 = int_to_ptr.vmem [resolvable:$true] %s52
      %55 = dma.hbm_to_vmem [thread:$0]  %s51, 16, %s53, [#allocation6]
    $region13: #{tpu_custom_call.1} parent=1 // pred_fallthru
      _
    // Predicated region
    $region14: #{tpu_custom_call.1} parent=1 // pred_check
      _
    $region15: #{tpu_custom_call.1} parent=1 // pred_check_branch
      %57 = sbr.rel (0) target = $region17
    $region16: #{tpu_custom_call.1} parent=1 // pred_region
      %59 = vsyncadd [#allocation9], 0
      %s60 = sshll.u32 %s3, 4
      %s61 = int_to_ptr.hbm [resolvable:$true] %s60
      %s62 = sshll.u32 [#allocation8], 4
      %s63 = int_to_ptr.vmem [resolvable:$true] %s62
      %68 = dma.hbm_to_vmem [thread:$0]  %s61, 1024, %s63, [#allocation9], 128, 128, 8
    $region17: #{tpu_custom_call.1} parent=1 // pred_fallthru
      _
    // Predicated region
    $region18: #{tpu_custom_call.1} parent=1 // pred_check
      _
    $region19: #{tpu_custom_call.1} parent=1 // pred_check_branch
      %70 = sbr.rel (0) target = $region21
    $region20: #{tpu_custom_call.1} parent=1 // pred_region
      %72 = vsyncadd [#allocation9], 0
      %s73 = sshll.u32 %s4, 4
      %s74 = int_to_ptr.hbm [resolvable:$true] %s73
      %s75 = sshll.u32 [#allocation10], 4
      %s76 = int_to_ptr.vmem [resolvable:$true] %s75
      %81 = dma.hbm_to_vmem [thread:$0]  %s74, 32, %s76, [#allocation9], 16, 16, 1
    $region21: #{tpu_custom_call.1} parent=1 // pred_fallthru
      _
    // Predicated region
    $region22: #{tpu_custom_call.1} parent=1 // pred_check
      _
    $region23: #{tpu_custom_call.1} parent=1 // pred_check_branch
      %83 = sbr.rel (0) target = $region25
    $region24: #{tpu_custom_call.1} parent=1 // pred_region
      %85 = vsyncadd [#allocation12], 0
      %s86 = sshll.u32 %s5, 4
      %s87 = int_to_ptr.hbm [resolvable:$true] %s86
      %s88 = sshll.u32 [#allocation11], 4
      %s89 = int_to_ptr.vmem [resolvable:$true] %s88
      %94 = dma.hbm_to_vmem [thread:$0]  %s87, 1536, %s89, [#allocation12], 128, 128, 8
    $region25: #{tpu_custom_call.1} parent=1 // pred_fallthru
      _
    // Predicated region
    $region26: #{tpu_custom_call.1} parent=1 // pred_check
      _
    $region27: #{tpu_custom_call.1} parent=1 // pred_check_branch
      %96 = sbr.rel (0) target = $region29
    $region28: #{tpu_custom_call.1} parent=1 // pred_region
      _
    $region29: #{tpu_custom_call.1} parent=1 // pred_fallthru
      _
    // Predicated region
    $region30: #{tpu_custom_call.1} parent=1 // pred_check
      _
    $region31: #{tpu_custom_call.1} parent=1 // pred_check_branch
      %98 = sbr.rel (0) target = $region33
    $region32: #{tpu_custom_call.1} parent=1 // pred_region
      %100 = vsyncadd [#allocation12], 0
      %s101 = sshll.u32 %s7, 4
      %s102 = int_to_ptr.hbm [resolvable:$true] %s101
      %s103 = sshll.u32 [#allocation13], 4
      %s104 = int_to_ptr.vmem [resolvable:$true] %s103
      %109 = dma.hbm_to_vmem [thread:$0]  %s102, 1536, %s104, [#allocation12], 128, 128, 8
    $region33: #{tpu_custom_call.1} parent=1 // pred_fallthru
      _
    // Predicated region
    $region34: #{tpu_custom_call.1} parent=1 // pred_check
      _
    $region35: #{tpu_custom_call.1} parent=1 // pred_check_branch
      %111 = sbr.rel (0) target = $region37
    $region36: #{tpu_custom_call.1} parent=1 // pred_region
      _
    $region37: #{tpu_custom_call.1} parent=1 // pred_fallthru
      _
    // Predicated region
    $region38: #{tpu_custom_call.1} parent=1 // pred_check
      _
    $region39: #{tpu_custom_call.1} parent=1 // pred_check_branch
      %113 = sbr.rel (0) target = $region41
    $region40: #{tpu_custom_call.1} parent=1 // pred_region
      %115 = dma.done [#allocation3], 256
    $region41: #{tpu_custom_call.1} parent=1 // pred_fallthru
      _
    // Predicated region
    $region42: #{tpu_custom_call.1} parent=1 // pred_check
      _
    $region43: #{tpu_custom_call.1} parent=1 // pred_check_branch
      %117 = sbr.rel (0) target = $region45
    $region44: #{tpu_custom_call.1} parent=1 // pred_region
      %119 = dma.done [#allocation6], 256
    $region45: #{tpu_custom_call.1} parent=1 // pred_fallthru
      _
    // Predicated region
    $region46: #{tpu_custom_call.1} parent=1 // pred_check
      _
    $region47: #{tpu_custom_call.1} parent=1 // pred_check_branch
      %121 = sbr.rel (0) target = $region49
    $region48: #{tpu_custom_call.1} parent=1 // pred_region
      %123 = dma.done [#allocation6], 16
    $region49: #{tpu_custom_call.1} parent=1 // pred_fallthru
      _
    // Predicated region
    $region50: #{tpu_custom_call.1} parent=1 // pred_check
      _
    $region51: #{tpu_custom_call.1} parent=1 // pred_check_branch
      %125 = sbr.rel (0) target = $region53
    $region52: #{tpu_custom_call.1} parent=1 // pred_region
      %127 = dma.done [#allocation9], 1024
    $region53: #{tpu_custom_call.1} parent=1 // pred_fallthru
      _
    // Predicated region
    $region54: #{tpu_custom_call.1} parent=1 // pred_check
      _
    $region55: #{tpu_custom_call.1} parent=1 // pred_check_branch
      %129 = sbr.rel (0) target = $region57
    $region56: #{tpu_custom_call.1} parent=1 // pred_region
      %131 = dma.done [#allocation9], 32
    $region57: #{tpu_custom_call.1} parent=1 // pred_fallthru
      _
    // Predicated region
    $region58: #{tpu_custom_call.1} parent=1 // pred_check
      _
    $region59: #{tpu_custom_call.1} parent=1 // pred_check_branch
      %133 = sbr.rel (0) target = $region61
    $region60: #{tpu_custom_call.1} parent=1 // pred_region
      %135 = dma.done [#allocation12], 1536
    $region61: #{tpu_custom_call.1} parent=1 // pred_fallthru
      _
    // Predicated region
    $region62: #{tpu_custom_call.1} parent=1 // pred_check
      _
    $region63: #{tpu_custom_call.1} parent=1 // pred_check_branch
      %137 = sbr.rel (0) target = $region65
    $region64: #{tpu_custom_call.1} parent=1 // pred_region
      %139 = dma.done [#allocation12], 1536
    $region65: #{tpu_custom_call.1} parent=1 // pred_fallthru
      _
    %v140 = vld [vmem:[#allocation2] sm:$0xff]
    %v141 = vld [vmem:[#allocation2 + $0x8] sm:$0xff]
    %v142 = vld [vmem:[#allocation5] sm:$0xff]
    %v143 = vld [vmem:[#allocation5 + $0x8] sm:$0xff]
    %v144 = vld [vmem:[#allocation7] sm:$0x1]
    %v146 = vperm.slane %v144, 0
    %vm148 = vcmask 130048
    %v150 = vsel %vm148, %v140, 0
    %v153 = vsel %vm148, %v141, 0
    %155 = vmatpush.msra.mxu0 0.0
    %156 = vmatpush.msra.mxu0 0.0
    %157 = vmatpush.msra.mxu0 0.0
    %158 = vmatpush.msra.mxu0 0.0
    %159 = vmatpush.msra.mxu0 0.0
    %160 = vmatpush.msra.mxu0 0.0
    %161 = vmatpush.msra.mxu0 0.0
    %162 = vmatpush.msra.mxu0 0.0
    %163 = vmatpush.msra.mxu0 0.0
    %164 = vmatpush.msra.mxu0 0.0
    %165 = vmatpush.msra.mxu0 0.0
    %166 = vmatpush.msra.mxu0 0.0
    %167 = vmatpush.msra.mxu0 0.0
    %168 = vmatpush.msra.mxu0 0.0
    %169 = vmatpush.msra.mxu0 %v143
    %170 = vmatpush.msra.mxu0 %v142
    %171 = vmatmul.f32.gmra.mxu0 %v150
    %v172 = vpop.f32.mrf.mxu0
    %v173 = vadd.f32 %v146, %v172
    %174 = vmatmul.f32.gmra.mxu0 %v153
    %v175 = vpop.f32.mrf.mxu0
    %v176 = vadd.f32 %v146, %v175
    %177 = vdwg.mxu0
    %v178 = vmax.f32 %v173, 0.0
    %v179 = vmax.f32 %v176, 0.0
    %vm180 = vcmask 261120
    %v181 = vsel %vm180, %v178, -inf
    %v182 = vrot.slane %v181, 4
    %v183 = vmax.f32 %v181, %v182
    %v184 = vrot.slane %v183, 2
    %v185 = vmax.f32 %v183, %v184
    %v186 = vrot.slane %v185, 1
    %v187 = vmax.f32 %v185, %v186
    %v188 = vsel %vm180, %v179, -inf
    %v189 = vrot.slane %v188, 4
    %v190 = vmax.f32 %v188, %v189
    %v191 = vrot.slane %v190, 2
    %v192 = vmax.f32 %v190, %v191
    %v193 = vrot.slane %v192, 1
    %v194 = vmax.f32 %v192, %v193
    %v195 = vld [vmem:[#allocation8] sm:$0xff]
    %v196 = vld [vmem:[#allocation8 + $0x8] sm:$0xff]
    %v197 = vld [vmem:[#allocation8 + $0x10] sm:$0xff]
    %v198 = vld [vmem:[#allocation8 + $0x18] sm:$0xff]
    %v199 = vld [vmem:[#allocation10] sm:$0x1]
    %v201 = vperm.slane %v199, 0
    %vm205 = vcmask 1041409
    %v206 = vsel %vm205, %v194, %v187
    %v207 = vsel %vm180, %v206, 0
    %209 = vmatpush.msra.mxu0 0.0
    %210 = vmatpush.msra.mxu0 0.0
    %211 = vmatpush.msra.mxu0 0.0
    %212 = vmatpush.msra.mxu0 0.0
    %213 = vmatpush.msra.mxu0 0.0
    %214 = vmatpush.msra.mxu0 0.0
    %215 = vmatpush.msra.mxu0 0.0
    %216 = vmatpush.msra.mxu0 0.0
    %217 = vmatpush.msra.mxu0 0.0
    %218 = vmatpush.msra.mxu0 0.0
    %219 = vmatpush.msra.mxu0 0.0
    %220 = vmatpush.msra.mxu0 0.0
    %221 = vmatpush.msra.mxu0 %v198
    %222 = vmatpush.msra.mxu0 %v197
    %223 = vmatpush.msra.mxu0 %v196
    %224 = vmatpush.msra.mxu0 %v195
    %225 = vmatmul.f32.gmra.mxu0 %v207
    %v226 = vpop.f32.mrf.mxu0
    %v227 = vadd.f32 %v201, %v226
    %228 = vdwg.mxu0
    %v229 = vmax.f32 %v227, 0.0
    %s230 = scalar_lea.vmem [#allocation8], 32
    %v231 = vld [vmem:[%s230] sm:$0xff]
    %v232 = vld [vmem:[%s230 + $0x8] sm:$0xff]
    %v233 = vld [vmem:[%s230 + $0x10] sm:$0xff]
    %v234 = vld [vmem:[%s230 + $0x18] sm:$0xff]
    %s235 = scalar_lea.vmem [#allocation10], 1
    %v236 = vld [vmem:[%s235] sm:$0x1]
    %v238 = vperm.slane %v236, 0
    %240 = vmatpush.msra.mxu0 0.0
    %241 = vmatpush.msra.mxu0 0.0
    %242 = vmatpush.msra.mxu0 0.0
    %243 = vmatpush.msra.mxu0 0.0
    %244 = vmatpush.msra.mxu0 0.0
    %245 = vmatpush.msra.mxu0 0.0
    %246 = vmatpush.msra.mxu0 0.0
    %247 = vmatpush.msra.mxu0 0.0
    %248 = vmatpush.msra.mxu0 0.0
    %249 = vmatpush.msra.mxu0 0.0
    %250 = vmatpush.msra.mxu0 0.0
    %251 = vmatpush.msra.mxu0 0.0
    %252 = vmatpush.msra.mxu0 %v234
    %253 = vmatpush.msra.mxu0 %v233
    %254 = vmatpush.msra.mxu0 %v232
    %255 = vmatpush.msra.mxu0 %v231
    %256 = vmatmul.f32.gmra.mxu0 %v207
    %v257 = vpop.f32.mrf.mxu0
    %v258 = vadd.f32 %v238, %v257
    %259 = vdwg.mxu0
    %v260 = vmax.f32 %v258, 0.0
    %v261 = vld [vmem:[#allocation11] sm:$0xff]
    %v262 = vld [vmem:[#allocation11 + $0x8] sm:$0xff]
    %v263 = vld [vmem:[#allocation11 + $0x10] sm:$0xff]
    %v264 = vld [vmem:[#allocation11 + $0x18] sm:$0xff]
    %v265 = vld [vmem:[%s6] sm:$0x1]
    %v267 = vperm.slane %v265, 0
    %v270 = vsel %vm180, %v229, 0
    %272 = vmatpush.msra.mxu0 0.0
    %273 = vmatpush.msra.mxu0 0.0
    %274 = vmatpush.msra.mxu0 0.0
    %275 = vmatpush.msra.mxu0 0.0
    %276 = vmatpush.msra.mxu0 0.0
    %277 = vmatpush.msra.mxu0 0.0
    %278 = vmatpush.msra.mxu0 0.0
    %279 = vmatpush.msra.mxu0 0.0
    %280 = vmatpush.msra.mxu0 0.0
    %281 = vmatpush.msra.mxu0 0.0
    %282 = vmatpush.msra.mxu0 0.0
    %283 = vmatpush.msra.mxu0 0.0
    %284 = vmatpush.msra.mxu0 %v264
    %285 = vmatpush.msra.mxu0 %v263
    %286 = vmatpush.msra.mxu0 %v262
    %287 = vmatpush.msra.mxu0 %v261
    %288 = vmatmul.f32.gmra.mxu0 %v270
    %v289 = vpop.f32.mrf.mxu0
    %v290 = vadd.f32 %v267, %v289
    %291 = vdwg.mxu0
    %v292 = vmax.f32 %v290, 0.0
    %v293 = vld [vmem:[#allocation13] sm:$0xff]
    %v294 = vld [vmem:[#allocation13 + $0x8] sm:$0xff]
    %v295 = vld [vmem:[#allocation13 + $0x10] sm:$0xff]
    %v296 = vld [vmem:[#allocation13 + $0x18] sm:$0xff]
    %v297 = vld [vmem:[%s8] sm:$0x1]
    %v299 = vperm.slane %v297, 0
    %v302 = vsel %vm180, %v292, 0
    %304 = vmatpush.msra.mxu0 0.0
    %305 = vmatpush.msra.mxu0 0.0
    %306 = vmatpush.msra.mxu0 0.0
    %307 = vmatpush.msra.mxu0 0.0
    %308 = vmatpush.msra.mxu0 0.0
    %309 = vmatpush.msra.mxu0 0.0
    %310 = vmatpush.msra.mxu0 0.0
    %311 = vmatpush.msra.mxu0 0.0
    %312 = vmatpush.msra.mxu0 0.0
    %313 = vmatpush.msra.mxu0 0.0
    %314 = vmatpush.msra.mxu0 0.0
    %315 = vmatpush.msra.mxu0 0.0
    %316 = vmatpush.msra.mxu0 %v296
    %317 = vmatpush.msra.mxu0 %v295
    %318 = vmatpush.msra.mxu0 %v294
    %319 = vmatpush.msra.mxu0 %v293
    %320 = vmatmul.f32.gmra.mxu0 %v302
    %v321 = vpop.f32.mrf.mxu0
    %v322 = vadd.f32 %v299, %v321
    %323 = vdwg.mxu0
    %s324 = scalar_lea.vmem [#allocation11], 32
    %v325 = vld [vmem:[%s324] sm:$0xff]
    %v326 = vld [vmem:[%s324 + $0x8] sm:$0xff]
    %v327 = vld [vmem:[%s324 + $0x10] sm:$0xff]
    %v328 = vld [vmem:[%s324 + $0x18] sm:$0xff]
    %s329 = scalar_lea.vmem %s6, 1
    %v330 = vld [vmem:[%s329] sm:$0x1]
    %v332 = vperm.slane %v330, 0
    %v335 = vsel %vm180, %v260, 0
    %337 = vmatpush.msra.mxu0 0.0
    %338 = vmatpush.msra.mxu0 0.0
    %339 = vmatpush.msra.mxu0 0.0
    %340 = vmatpush.msra.mxu0 0.0
    %341 = vmatpush.msra.mxu0 0.0
    %342 = vmatpush.msra.mxu0 0.0
    %343 = vmatpush.msra.mxu0 0.0
    %344 = vmatpush.msra.mxu0 0.0
    %345 = vmatpush.msra.mxu0 0.0
    %346 = vmatpush.msra.mxu0 0.0
    %347 = vmatpush.msra.mxu0 0.0
    %348 = vmatpush.msra.mxu0 0.0
    %349 = vmatpush.msra.mxu0 %v328
    %350 = vmatpush.msra.mxu0 %v327
    %351 = vmatpush.msra.mxu0 %v326
    %352 = vmatpush.msra.mxu0 %v325
    %353 = vmatmul.f32.gmra.mxu0 %v335
    %v354 = vpop.f32.mrf.mxu0
    %v355 = vadd.f32 %v332, %v354
    %356 = vdwg.mxu0
    %v357 = vmax.f32 %v355, 0.0
    %s358 = scalar_lea.vmem [#allocation13], 32
    %v359 = vld [vmem:[%s358] sm:$0xff]
    %v360 = vld [vmem:[%s358 + $0x8] sm:$0xff]
    %v361 = vld [vmem:[%s358 + $0x10] sm:$0xff]
    %v362 = vld [vmem:[%s358 + $0x18] sm:$0xff]
    %s363 = scalar_lea.vmem %s8, 1
    %v364 = vld [vmem:[%s363] sm:$0x1]
    %v366 = vperm.slane %v364, 0
    %v369 = vsel %vm180, %v357, 0
    %371 = vmatpush.msra.mxu0 0.0
    %372 = vmatpush.msra.mxu0 0.0
    %373 = vmatpush.msra.mxu0 0.0
    %374 = vmatpush.msra.mxu0 0.0
    %375 = vmatpush.msra.mxu0 0.0
    %376 = vmatpush.msra.mxu0 0.0
    %377 = vmatpush.msra.mxu0 0.0
    %378 = vmatpush.msra.mxu0 0.0
    %379 = vmatpush.msra.mxu0 0.0
    %380 = vmatpush.msra.mxu0 0.0
    %381 = vmatpush.msra.mxu0 0.0
    %382 = vmatpush.msra.mxu0 0.0
    %383 = vmatpush.msra.mxu0 %v362
    %384 = vmatpush.msra.mxu0 %v361
    %385 = vmatpush.msra.mxu0 %v360
    %386 = vmatpush.msra.mxu0 %v359
    %387 = vmatmul.f32.gmra.mxu0 %v369
    %v388 = vpop.f32.mrf.mxu0
    %v389 = vadd.f32 %v366, %v388
    %390 = vdwg.mxu0
    %s391 = scalar_lea.vmem [#allocation11], 64
    %v392 = vld [vmem:[%s391] sm:$0xff]
    %v393 = vld [vmem:[%s391 + $0x8] sm:$0xff]
    %v394 = vld [vmem:[%s391 + $0x10] sm:$0xff]
    %v395 = vld [vmem:[%s391 + $0x18] sm:$0xff]
    %s396 = scalar_lea.vmem %s6, 2
    %v397 = vld [vmem:[%s396] sm:$0x1]
    %v399 = vperm.slane %v397, 0
    %401 = vmatpush.msra.mxu0 0.0
    %402 = vmatpush.msra.mxu0 0.0
    %403 = vmatpush.msra.mxu0 0.0
    %404 = vmatpush.msra.mxu0 0.0
    %405 = vmatpush.msra.mxu0 0.0
    %406 = vmatpush.msra.mxu0 0.0
    %407 = vmatpush.msra.mxu0 0.0
    %408 = vmatpush.msra.mxu0 0.0
    %409 = vmatpush.msra.mxu0 0.0
    %410 = vmatpush.msra.mxu0 0.0
    %411 = vmatpush.msra.mxu0 0.0
    %412 = vmatpush.msra.mxu0 0.0
    %413 = vmatpush.msra.mxu0 %v395
    %414 = vmatpush.msra.mxu0 %v394
    %415 = vmatpush.msra.mxu0 %v393
    %416 = vmatpush.msra.mxu0 %v392
    %417 = vmatmul.f32.gmra.mxu0 %v270
    %v418 = vpop.f32.mrf.mxu0
    %v419 = vadd.f32 %v399, %v418
    %420 = vdwg.mxu0
    %v421 = vmax.f32 %v419, 0.0
    %s422 = scalar_lea.vmem [#allocation13], 64
    %v423 = vld [vmem:[%s422] sm:$0xff]
    %v424 = vld [vmem:[%s422 + $0x8] sm:$0xff]
    %v425 = vld [vmem:[%s422 + $0x10] sm:$0xff]
    %v426 = vld [vmem:[%s422 + $0x18] sm:$0xff]
    %s427 = scalar_lea.vmem %s8, 2
    %v428 = vld [vmem:[%s427] sm:$0x1]
    %v430 = vperm.slane %v428, 0
    %v433 = vsel %vm180, %v421, 0
    %435 = vmatpush.msra.mxu0 0.0
    %436 = vmatpush.msra.mxu0 0.0
    %437 = vmatpush.msra.mxu0 0.0
    %438 = vmatpush.msra.mxu0 0.0
    %439 = vmatpush.msra.mxu0 0.0
    %440 = vmatpush.msra.mxu0 0.0
    %441 = vmatpush.msra.mxu0 0.0
    %442 = vmatpush.msra.mxu0 0.0
    %443 = vmatpush.msra.mxu0 0.0
    %444 = vmatpush.msra.mxu0 0.0
    %445 = vmatpush.msra.mxu0 0.0
    %446 = vmatpush.msra.mxu0 0.0
    %447 = vmatpush.msra.mxu0 %v426
    %448 = vmatpush.msra.mxu0 %v425
    %449 = vmatpush.msra.mxu0 %v424
    %450 = vmatpush.msra.mxu0 %v423
    %451 = vmatmul.f32.gmra.mxu0 %v433
    %v452 = vpop.f32.mrf.mxu0
    %v453 = vadd.f32 %v430, %v452
    %454 = vdwg.mxu0
    %v458 = vrot.slane %v389, 6
    %v459 = vrot.slane %v453, 4
    %vm460 = vcmask 1041408
    %v461 = vsel %vm460, %v322, %v458
    %vm462 = vcmask 1043456
    %v463 = vsel %vm462, %v461, %v459
    %465 = vst [vmem:[#allocation14] sm:$0x3f] %v463
    // Predicated region
    $region66: #{tpu_custom_call.1} parent=1 // pred_check
      _
    $region67: #{tpu_custom_call.1} parent=1 // pred_check_branch
      %467 = sbr.rel (0) target = $region69
    $region68: #{tpu_custom_call.1} parent=1 // pred_region
      %469 = vsyncadd [#allocation4], 0
      %s471 = sshll.u32 [#allocation14], 4
      %s472 = int_to_ptr.vmem [resolvable:$true] %s471
      %s473 = sshll.u32 %s9, 4
      %s474 = int_to_ptr.hbm [resolvable:$true] %s473
      %476 = dma.vmem_to_hbm [thread:$0]  %s472, 96, %s474, [#allocation4]
    $region69: #{tpu_custom_call.1} parent=1 // pred_fallthru
      _
    // Predicated region
    $region70: #{tpu_custom_call.1} parent=1 // pred_check
      _
    $region71: #{tpu_custom_call.1} parent=1 // pred_check_branch
      %478 = sbr.rel (0) target = $region73
    $region72: #{tpu_custom_call.1} parent=1 // pred_region
      %480 = dma.done [#allocation4], 96
    $region73: #{tpu_custom_call.1} parent=1 // pred_fallthru
      _
    %481 = vsyncpa [#allocation3], 1
    %482 = vsyncpa [#allocation6], 1
    %483 = vsyncpa [#allocation9], 1
    %484 = vsyncpa [#allocation12], 1
    %485 = vsyncpa [#allocation4], 1

</llo_original>
